<compile_context>
chip_gen: v6e
topology: v6e:2x2x1
jax: 0.10.0
libtpu: 0.0.40
codegen_flags: <defaults>
</compile_context>

<pallas_src>
import functools

import jax
import jax.numpy as jnp
from jax import lax
from jax.experimental import pallas as pl
from jax.experimental.pallas import tpu as pltpu


def _dice_kernel(x_ref, t_ref, out_ref, inter_acc, card_acc, *, hw, needs_mask):
    """Grid = (batch, pixel-row tile).

    x_ref:     (C, S, 128) logits block  -- pixels fill sublanes AND lanes
    t_ref:     (1, S, 128) int32 target class indices
    out_ref:   (1, 1)      final dice loss (written on the last grid step)
    inter_acc: (C, 128) f32 running partial of sum(probas * one_hot)
    card_acc:  (C, 128) f32 running partial of sum(probas) + sum(one_hot)
    """
    bi = pl.program_id(0)
    pi = pl.program_id(1)
    C, S, _ = x_ref.shape

    @pl.when((bi == 0) & (pi == 0))
    def _():
        inter_acc[...] = jnp.zeros_like(inter_acc)
        card_acc[...] = jnp.zeros_like(card_acc)

    # ---- softmax over classes, streamed per class; all ops on (S, 128) ----
    m = x_ref[0].astype(jnp.float32)
    for c in range(1, C):
        m = jnp.maximum(m, x_ref[c].astype(jnp.float32))

    s = jnp.exp(x_ref[0].astype(jnp.float32) - m)
    for c in range(1, C):
        s = s + jnp.exp(x_ref[c].astype(jnp.float32) - m)

    r = pl.reciprocal(s, approx=True)        # EUP
    r = r * (2.0 - s * r)                    # one Newton step -> ~f32 accurate

    t = t_ref[0]                             # (S, 128) int32

    if needs_mask:
        rows = lax.broadcasted_iota(jnp.int32, (S, 128), 0)
        lanes = lax.broadcasted_iota(jnp.int32, (S, 128), 1)
        valid = ((pi * S + rows) * 128 + lanes) < hw   # garbage/pad lanes -> False

    # ---- per-class contributions; reduce over sublanes before the tiny RMW ----
    for c in range(C):
        prob_c = jnp.exp(x_ref[c].astype(jnp.float32) - m) * r   # (S, 128)
        hot = t == c
        if needs_mask:
            prob_c = jnp.where(valid, prob_c, 0.0)
            hot = hot & valid
        inter_c = jnp.where(hot, prob_c, 0.0)            # probas * one_hot
        card_c = jnp.where(hot, prob_c + 1.0, prob_c)    # probas + one_hot
        inter_acc[c:c + 1, :] += jnp.sum(inter_c, axis=0, keepdims=True)
        card_acc[c:c + 1, :] += jnp.sum(card_c, axis=0, keepdims=True)

    @pl.when((bi == pl.num_programs(0) - 1) & (pi == pl.num_programs(1) - 1))
    def _():
        eps = jnp.float32(1e-7)
        inter = 2.0 * jnp.sum(inter_acc[...], axis=1, keepdims=True) + eps   # (C, 1)
        card = jnp.sum(card_acc[...], axis=1, keepdims=True) + eps           # (C, 1)
        dice = 1.0 - jnp.mean(inter / card)
        out_ref[...] = jnp.reshape(dice, (1, 1)).astype(out_ref.dtype)


def _vmem_budget_and_limit():
    """(data budget, vmem_limit_bytes), scaled to this chip's physical VMEM."""
    cap = 64 * 1024 * 1024                      # conservative fallback (v7x per-TC)
    try:
        cap = int(pltpu.get_tpu_info().vmem_capacity_bytes)
    except Exception:
        pass
    # ~45% of physical VMEM for the pipelined working set; raise the scoped
    # compile-time limit to ~70% so the bigger tiles are accepted
    # (default scoped limit is only 16/32 MiB).
    return int(cap * 0.45), int(cap * 0.70)


def _sanitize_rows(s, r):
    """Make s a legal block extent for the second-to-last dim: mult of 8 or == r."""
    s = max(1, min(int(s), r))
    if s == r:
        return s
    if r <= 8:
        return r
    return max(8, (s // 8) * 8)


def _prefer_divisor(s, r):
    """Prefer a tile that divides r exactly (masking compiles out), if the cost
    is at most ~2x more grid steps."""
    if s >= r or r % s == 0:
        return s
    cand = (s // 8) * 8
    lo = max(8, s // 2)
    while cand >= lo:
        if r % cand == 0:
            return cand
        cand -= 8
    return s


def _choose_tile_rows(C, R, itemsize, budget_bytes):
    """Rows of 128 pixels per grid step."""
    # double-buffered logits + double-buffered int32 targets + ~6 f32 row-wide
    # temporaries (m, s/r, t, mask, transients) the compiler keeps in VMEM.
    per_row = 128 * (2 * C * itemsize + 2 * 4 + 6 * 4)
    s = max(1, budget_bytes // per_row)
    s = _sanitize_rows(s, R)
    return _prefer_divisor(s, R)


def generalized_dice_loss(inputs, targets, *, tile_rows=None):
    """inputs: (N, C, H, W) logits (any float dtype).
    targets: (N, 1, H, W) or (N, H, W) integer class indices."""
    N, C, H, W = inputs.shape
    HW = H * W
    HWp = ((HW + 127) // 128) * 128
    R = HWp // 128

    # free reshapes only (no HBM transpose); dtype kept, cast happens in-vregs
    x = inputs.reshape(N, C, HW)
    if targets.ndim == 4:
        targets = targets[:, 0]
    t = targets.astype(jnp.int32).reshape(N, 1, HW)

    if HWp != HW:
        # TODO(synk): this pad is one extra HBM copy; only hit when H*W is not
        # a multiple of 128 (rare for segmentation shapes).
        x = jnp.pad(x, ((0, 0), (0, 0), (0, HWp - HW)))
        t = jnp.pad(t, ((0, 0), (0, 0), (0, HWp - HW)))

    x = x.reshape(N, C, R, 128)     # pixels now fill (sublane, lane)
    t = t.reshape(N, 1, R, 128)

    budget, vmem_limit = _vmem_budget_and_limit()
    if tile_rows is None:
        S = _choose_tile_rows(C, R, jnp.dtype(inputs.dtype).itemsize, budget)
    else:
        S = _prefer_divisor(_sanitize_rows(tile_rows, R), R)

    needs_mask = (HWp != HW) or (R % S != 0)
    grid = (N, pl.cdiv(R, S))

    kernel = functools.partial(_dice_kernel, hw=HW, needs_mask=needs_mask)

    out = pl.pallas_call(
        kernel,
        out_shape=jax.ShapeDtypeStruct((1, 1), jnp.float32),
        grid_spec=pltpu.PrefetchScalarGridSpec(
            num_scalar_prefetch=0,
            grid=grid,
            in_specs=[
                # squeezed batch dim -> kernel sees (C, S, 128)
                pl.BlockSpec((None, C, S, 128), lambda n, p: (n, 0, p, 0)),
                pl.BlockSpec((None, 1, S, 128), lambda n, p: (n, 0, p, 0)),
            ],
            out_specs=pl.BlockSpec((1, 1), lambda n, p: (0, 0)),
            scratch_shapes=[
                pltpu.VMEM((C, 128), jnp.float32),   # intersection partials
                pltpu.VMEM((C, 128), jnp.float32),   # cardinality partials
            ],
        ),
        compiler_params=pltpu.CompilerParams(
            dimension_semantics=("arbitrary", "arbitrary"),
            vmem_limit_bytes=vmem_limit),
    )(x, t)
    return out[0, 0]


def _reference(inputs, targets, eps=1e-7):
    """Pure-JAX reference mirroring the PyTorch forward (returned value only)."""
    if targets.ndim == 4:
        targets = targets[:, 0]
    C = inputs.shape[1]
    probas = jax.nn.softmax(inputs.astype(jnp.float32), axis=1)
    onehot = jnp.transpose(
        jax.nn.one_hot(targets, C, dtype=jnp.float32), (0, 3, 1, 2))
    dims = (0, 2, 3)
    intersection = 2.0 * jnp.sum(probas * onehot, axis=dims) + eps
    cardinality = jnp.sum(probas, axis=dims) + jnp.sum(onehot, axis=dims) + eps
    return 1.0 - jnp.mean(intersection / cardinality)


if __name__ == "__main__":
    key = jax.random.PRNGKey(0)

    # deterministic "class_weights" from the module __init__ (the returned dice
    # value never depends on them; kept only for fidelity with the signature)
    class_weights = jnp.array([1.0, 2.0, 0.5, 1.5], dtype=jnp.float32)
    del class_weights

    k1, k2, k3, k4 = jax.random.split(key, 4)

    # case 1: aligned pixel count (mask compiled out)
    N, C, H, W = 2, 4, 16, 16
    inputs = jax.random.normal(k1, (N, C, H, W), dtype=jnp.float32)
    targets = jax.random.randint(k2, (N, 1, H, W), 0, C, dtype=jnp.int32)
    loss = jax.block_until_ready(generalized_dice_loss(inputs, targets))
    ref = jax.block_until_ready(_reference(inputs, targets))
    assert jnp.allclose(loss, ref, atol=1e-5, rtol=1e-5), (loss, ref)

    # case 2: H*W not a multiple of 128 (pad + masked path)
    N2, C2, H2, W2 = 2, 3, 10, 10
    inputs2 = jax.random.normal(k3, (N2, C2, H2, W2), dtype=jnp.float32)
    targets2 = jax.random.randint(k4, (N2, 1, H2, W2), 0, C2, dtype=jnp.int32)
    loss2 = jax.block_until_ready(generalized_dice_loss(inputs2, targets2))
    ref2 = jax.block_until_ready(_reference(inputs2, targets2))
    assert jnp.allclose(loss2, ref2, atol=1e-5, rtol=1e-5), (loss2, ref2)

    print("KERNEL_OK")
</pallas_src>

<mosaic_0001>
module attributes {stable_mosaic.version = 11 : i64} {
  func.func @_dice_kernel(%arg0: i32, %arg1: i32, %arg2: memref<1x4x2x128xf32, #tpu.memory_space<vmem>>, %arg3: memref<1x1x2x128xi32, #tpu.memory_space<vmem>>, %arg4: memref<1x1xf32, #tpu.memory_space<vmem>>, %arg5: memref<4x128xf32, #tpu.memory_space<vmem>>, %arg6: memref<4x128xf32, #tpu.memory_space<vmem>>) attributes {dimension_semantics = [#tpu.dimension_semantics<arbitrary>, #tpu.dimension_semantics<arbitrary>], iteration_bounds = array<i64: 2, 1>, scalar_prefetch = 0 : i64, scratch_operands = 2 : i64, tpu.core_type = #tpu.core_type<tc>, window_params = [{transform_indices = @transform_0, window_bounds = array<i64: 1, 4, 2, 128>}, {transform_indices = @transform_1, window_bounds = array<i64: 1, 1, 2, 128>}, {pipeline_mode = #tpu.pipeline_mode<synchronous>, transform_indices = @transform_2, window_bounds = array<i64: 1, 1>}]} {
    %c0_i32 = arith.constant 0 : i32
    %0 = arith.cmpi eq, %arg0, %c0_i32 : i32
    %c0_i32_0 = arith.constant 0 : i32
    %1 = arith.cmpi eq, %arg1, %c0_i32_0 : i32
    %2 = arith.andi %0, %1 : i1
    %3 = arith.extui %2 : i1 to i32
    %c0_i32_1 = arith.constant 0 : i32
    %4 = arith.cmpi ne, %3, %c0_i32_1 : i32
    scf.if %4 {
      %cst_102 = arith.constant 0.000000e+00 : f32
      %135 = vector.broadcast %cst_102 : f32 to vector<4x128xf32>
      %c0_103 = arith.constant 0 : index
      %c0_104 = arith.constant 0 : index
      %136 = vector.load %arg5[%c0_103, %c0_104] : memref<4x128xf32, #tpu.memory_space<vmem>>, vector<4x128xf32>
      tpu.vector_store %arg5[%c0_103, %c0_104], %135 {strides = array<i32>} : memref<4x128xf32, #tpu.memory_space<vmem>>, vector<4x128xf32>,
      %cst_105 = arith.constant 0.000000e+00 : f32
      %137 = vector.broadcast %cst_105 : f32 to vector<4x128xf32>
      %c0_106 = arith.constant 0 : index
      %c0_107 = arith.constant 0 : index
      %138 = vector.load %arg6[%c0_106, %c0_107] : memref<4x128xf32, #tpu.memory_space<vmem>>, vector<4x128xf32>
      tpu.vector_store %arg6[%c0_106, %c0_107], %137 {strides = array<i32>} : memref<4x128xf32, #tpu.memory_space<vmem>>, vector<4x128xf32>,
    } else {
    }
    %c0 = arith.constant 0 : index
    %c0_2 = arith.constant 0 : index
    %c0_3 = arith.constant 0 : index
    %c0_4 = arith.constant 0 : index
    %5 = vector.load %arg2[%c0, %c0_2, %c0_3, %c0_4] : memref<1x4x2x128xf32, #tpu.memory_space<vmem>>, vector<1x1x2x128xf32>
    %6 = vector.shape_cast %5 : vector<1x1x2x128xf32> to vector<2x128xf32>
    %c0_5 = arith.constant 0 : index
    %c1 = arith.constant 1 : index
    %c0_6 = arith.constant 0 : index
    %c0_7 = arith.constant 0 : index
    %7 = vector.load %arg2[%c0_5, %c1, %c0_6, %c0_7] : memref<1x4x2x128xf32, #tpu.memory_space<vmem>>, vector<1x1x2x128xf32>
    %8 = vector.shape_cast %7 : vector<1x1x2x128xf32> to vector<2x128xf32>
    %9 = arith.maximumf %6, %8 : vector<2x128xf32>
    %c0_8 = arith.constant 0 : index
    %c2 = arith.constant 2 : index
    %c0_9 = arith.constant 0 : index
    %c0_10 = arith.constant 0 : index
    %10 = vector.load %arg2[%c0_8, %c2, %c0_9, %c0_10] : memref<1x4x2x128xf32, #tpu.memory_space<vmem>>, vector<1x1x2x128xf32>
    %11 = vector.shape_cast %10 : vector<1x1x2x128xf32> to vector<2x128xf32>
    %12 = arith.maximumf %9, %11 : vector<2x128xf32>
    %c0_11 = arith.constant 0 : index
    %c3 = arith.constant 3 : index
    %c0_12 = arith.constant 0 : index
    %c0_13 = arith.constant 0 : index
    %13 = vector.load %arg2[%c0_11, %c3, %c0_12, %c0_13] : memref<1x4x2x128xf32, #tpu.memory_space<vmem>>, vector<1x1x2x128xf32>
    %14 = vector.shape_cast %13 : vector<1x1x2x128xf32> to vector<2x128xf32>
    %15 = arith.maximumf %12, %14 : vector<2x128xf32>
    %c0_14 = arith.constant 0 : index
    %c0_15 = arith.constant 0 : index
    %c0_16 = arith.constant 0 : index
    %c0_17 = arith.constant 0 : index
    %16 = vector.load %arg2[%c0_14, %c0_15, %c0_16, %c0_17] : memref<1x4x2x128xf32, #tpu.memory_space<vmem>>, vector<1x1x2x128xf32>
    %17 = vector.shape_cast %16 : vector<1x1x2x128xf32> to vector<2x128xf32>
    %18 = arith.subf %17, %15 : vector<2x128xf32>
    %19 = math.exp %18 : vector<2x128xf32>
    %c0_18 = arith.constant 0 : index
    %c1_19 = arith.constant 1 : index
    %c0_20 = arith.constant 0 : index
    %c0_21 = arith.constant 0 : index
    %20 = vector.load %arg2[%c0_18, %c1_19, %c0_20, %c0_21] : memref<1x4x2x128xf32, #tpu.memory_space<vmem>>, vector<1x1x2x128xf32>
    %21 = vector.shape_cast %20 : vector<1x1x2x128xf32> to vector<2x128xf32>
    %22 = arith.subf %21, %15 : vector<2x128xf32>
    %23 = math.exp %22 : vector<2x128xf32>
    %24 = arith.addf %19, %23 : vector<2x128xf32>
    %c0_22 = arith.constant 0 : index
    %c2_23 = arith.constant 2 : index
    %c0_24 = arith.constant 0 : index
    %c0_25 = arith.constant 0 : index
    %25 = vector.load %arg2[%c0_22, %c2_23, %c0_24, %c0_25] : memref<1x4x2x128xf32, #tpu.memory_space<vmem>>, vector<1x1x2x128xf32>
    %26 = vector.shape_cast %25 : vector<1x1x2x128xf32> to vector<2x128xf32>
    %27 = arith.subf %26, %15 : vector<2x128xf32>
    %28 = math.exp %27 : vector<2x128xf32>
    %29 = arith.addf %24, %28 : vector<2x128xf32>
    %c0_26 = arith.constant 0 : index
    %c3_27 = arith.constant 3 : index
    %c0_28 = arith.constant 0 : index
    %c0_29 = arith.constant 0 : index
    %30 = vector.load %arg2[%c0_26, %c3_27, %c0_28, %c0_29] : memref<1x4x2x128xf32, #tpu.memory_space<vmem>>, vector<1x1x2x128xf32>
    %31 = vector.shape_cast %30 : vector<1x1x2x128xf32> to vector<2x128xf32>
    %32 = arith.subf %31, %15 : vector<2x128xf32>
    %33 = math.exp %32 : vector<2x128xf32>
    %34 = arith.addf %29, %33 : vector<2x128xf32>
    %35 = tpu.reciprocal %34 {approx = true} : vector<2x128xf32> -> vector<2x128xf32>
    %36 = arith.mulf %34, %35 : vector<2x128xf32>
    %cst = arith.constant 2.000000e+00 : f32
    %37 = vector.broadcast %cst : f32 to vector<2x128xf32>
    %38 = arith.subf %37, %36 : vector<2x128xf32>
    %39 = arith.mulf %35, %38 : vector<2x128xf32>
    %c0_30 = arith.constant 0 : index
    %c0_31 = arith.constant 0 : index
    %c0_32 = arith.constant 0 : index
    %c0_33 = arith.constant 0 : index
    %40 = vector.load %arg3[%c0_30, %c0_31, %c0_32, %c0_33] : memref<1x1x2x128xi32, #tpu.memory_space<vmem>>, vector<1x1x2x128xi32>
    %41 = vector.shape_cast %40 : vector<1x1x2x128xi32> to vector<2x128xi32>
    %c0_34 = arith.constant 0 : index
    %c0_35 = arith.constant 0 : index
    %c0_36 = arith.constant 0 : index
    %c0_37 = arith.constant 0 : index
    %42 = vector.load %arg2[%c0_34, %c0_35, %c0_36, %c0_37] : memref<1x4x2x128xf32, #tpu.memory_space<vmem>>, vector<1x1x2x128xf32>
    %43 = vector.shape_cast %42 : vector<1x1x2x128xf32> to vector<2x128xf32>
    %44 = arith.subf %43, %15 : vector<2x128xf32>
    %45 = math.exp %44 : vector<2x128xf32>
    %46 = arith.mulf %45, %39 : vector<2x128xf32>
    %c0_i32_38 = arith.constant 0 : i32
    %47 = vector.broadcast %c0_i32_38 : i32 to vector<2x128xi32>
    %48 = arith.cmpi eq, %41, %47 : vector<2x128xi32>
    %cst_39 = arith.constant 0.000000e+00 : f32
    %49 = vector.broadcast %cst_39 : f32 to vector<2x128xf32>
    %50 = arith.select %48, %46, %49 : vector<2x128xi1>, vector<2x128xf32>
    %cst_40 = arith.constant 1.000000e+00 : f32
    %51 = vector.broadcast %cst_40 : f32 to vector<2x128xf32>
    %52 = arith.addf %46, %51 : vector<2x128xf32>
    %53 = arith.select %48, %52, %46 : vector<2x128xi1>, vector<2x128xf32>
    %c0_41 = arith.constant 0 : index
    %c0_42 = arith.constant 0 : index
    %54 = vector.load %arg5[%c0_41, %c0_42] : memref<4x128xf32, #tpu.memory_space<vmem>>, vector<1x128xf32>
    %cst_43 = arith.constant dense<0.000000e+00> : vector<128xf32>
    %55 = vector.multi_reduction <add>, %50, %cst_43 [0] : vector<2x128xf32> to vector<128xf32>
    %56 = vector.shape_cast %55 : vector<128xf32> to vector<1x128xf32>
    %57 = arith.addf %54, %56 : vector<1x128xf32>
    %c0_44 = arith.constant 0 : index
    %c0_45 = arith.constant 0 : index
    %58 = vector.load %arg5[%c0_44, %c0_45] : memref<4x128xf32, #tpu.memory_space<vmem>>, vector<1x128xf32>
    tpu.vector_store %arg5[%c0_44, %c0_45], %57 {strides = array<i32>} : memref<4x128xf32, #tpu.memory_space<vmem>>, vector<1x128xf32>,
    %c0_46 = arith.constant 0 : index
    %c0_47 = arith.constant 0 : index
    %59 = vector.load %arg6[%c0_46, %c0_47] : memref<4x128xf32, #tpu.memory_space<vmem>>, vector<1x128xf32>
    %cst_48 = arith.constant dense<0.000000e+00> : vector<128xf32>
    %60 = vector.multi_reduction <add>, %53, %cst_48 [0] : vector<2x128xf32> to vector<128xf32>
    %61 = vector.shape_cast %60 : vector<128xf32> to vector<1x128xf32>
    %62 = arith.addf %59, %61 : vector<1x128xf32>
    %c0_49 = arith.constant 0 : index
    %c0_50 = arith.constant 0 : index
    %63 = vector.load %arg6[%c0_49, %c0_50] : memref<4x128xf32, #tpu.memory_space<vmem>>, vector<1x128xf32>
    tpu.vector_store %arg6[%c0_49, %c0_50], %62 {strides = array<i32>} : memref<4x128xf32, #tpu.memory_space<vmem>>, vector<1x128xf32>,
    %c0_51 = arith.constant 0 : index
    %c1_52 = arith.constant 1 : index
    %c0_53 = arith.constant 0 : index
    %c0_54 = arith.constant 0 : index
    %64 = vector.load %arg2[%c0_51, %c1_52, %c0_53, %c0_54] : memref<1x4x2x128xf32, #tpu.memory_space<vmem>>, vector<1x1x2x128xf32>
    %65 = vector.shape_cast %64 : vector<1x1x2x128xf32> to vector<2x128xf32>
    %66 = arith.subf %65, %15 : vector<2x128xf32>
    %67 = math.exp %66 : vector<2x128xf32>
    %68 = arith.mulf %67, %39 : vector<2x128xf32>
    %c1_i32 = arith.constant 1 : i32
    %69 = vector.broadcast %c1_i32 : i32 to vector<2x128xi32>
    %70 = arith.cmpi eq, %41, %69 : vector<2x128xi32>
    %cst_55 = arith.constant 0.000000e+00 : f32
    %71 = vector.broadcast %cst_55 : f32 to vector<2x128xf32>
    %72 = arith.select %70, %68, %71 : vector<2x128xi1>, vector<2x128xf32>
    %cst_56 = arith.constant 1.000000e+00 : f32
    %73 = vector.broadcast %cst_56 : f32 to vector<2x128xf32>
    %74 = arith.addf %68, %73 : vector<2x128xf32>
    %75 = arith.select %70, %74, %68 : vector<2x128xi1>, vector<2x128xf32>
    %c1_57 = arith.constant 1 : index
    %c0_58 = arith.constant 0 : index
    %76 = vector.load %arg5[%c1_57, %c0_58] : memref<4x128xf32, #tpu.memory_space<vmem>>, vector<1x128xf32>
    %cst_59 = arith.constant dense<0.000000e+00> : vector<128xf32>
    %77 = vector.multi_reduction <add>, %72, %cst_59 [0] : vector<2x128xf32> to vector<128xf32>
    %78 = vector.shape_cast %77 : vector<128xf32> to vector<1x128xf32>
    %79 = arith.addf %76, %78 : vector<1x128xf32>
    %c1_60 = arith.constant 1 : index
    %c0_61 = arith.constant 0 : index
    %80 = vector.load %arg5[%c1_60, %c0_61] : memref<4x128xf32, #tpu.memory_space<vmem>>, vector<1x128xf32>
    tpu.vector_store %arg5[%c1_60, %c0_61], %79 {strides = array<i32>} : memref<4x128xf32, #tpu.memory_space<vmem>>, vector<1x128xf32>,
    %c1_62 = arith.constant 1 : index
    %c0_63 = arith.constant 0 : index
    %81 = vector.load %arg6[%c1_62, %c0_63] : memref<4x128xf32, #tpu.memory_space<vmem>>, vector<1x128xf32>
    %cst_64 = arith.constant dense<0.000000e+00> : vector<128xf32>
    %82 = vector.multi_reduction <add>, %75, %cst_64 [0] : vector<2x128xf32> to vector<128xf32>
    %83 = vector.shape_cast %82 : vector<128xf32> to vector<1x128xf32>
    %84 = arith.addf %81, %83 : vector<1x128xf32>
    %c1_65 = arith.constant 1 : index
    %c0_66 = arith.constant 0 : index
    %85 = vector.load %arg6[%c1_65, %c0_66] : memref<4x128xf32, #tpu.memory_space<vmem>>, vector<1x128xf32>
    tpu.vector_store %arg6[%c1_65, %c0_66], %84 {strides = array<i32>} : memref<4x128xf32, #tpu.memory_space<vmem>>, vector<1x128xf32>,
    %c0_67 = arith.constant 0 : index
    %c2_68 = arith.constant 2 : index
    %c0_69 = arith.constant 0 : index
    %c0_70 = arith.constant 0 : index
    %86 = vector.load %arg2[%c0_67, %c2_68, %c0_69, %c0_70] : memref<1x4x2x128xf32, #tpu.memory_space<vmem>>, vector<1x1x2x128xf32>
    %87 = vector.shape_cast %86 : vector<1x1x2x128xf32> to vector<2x128xf32>
    %88 = arith.subf %87, %15 : vector<2x128xf32>
    %89 = math.exp %88 : vector<2x128xf32>
    %90 = arith.mulf %89, %39 : vector<2x128xf32>
    %c2_i32 = arith.constant 2 : i32
    %91 = vector.broadcast %c2_i32 : i32 to vector<2x128xi32>
    %92 = arith.cmpi eq, %41, %91 : vector<2x128xi32>
    %cst_71 = arith.constant 0.000000e+00 : f32
    %93 = vector.broadcast %cst_71 : f32 to vector<2x128xf32>
    %94 = arith.select %92, %90, %93 : vector<2x128xi1>, vector<2x128xf32>
    %cst_72 = arith.constant 1.000000e+00 : f32
    %95 = vector.broadcast %cst_72 : f32 to vector<2x128xf32>
    %96 = arith.addf %90, %95 : vector<2x128xf32>
    %97 = arith.select %92, %96, %90 : vector<2x128xi1>, vector<2x128xf32>
    %c2_73 = arith.constant 2 : index
    %c0_74 = arith.constant 0 : index
    %98 = vector.load %arg5[%c2_73, %c0_74] : memref<4x128xf32, #tpu.memory_space<vmem>>, vector<1x128xf32>
    %cst_75 = arith.constant dense<0.000000e+00> : vector<128xf32>
    %99 = vector.multi_reduction <add>, %94, %cst_75 [0] : vector<2x128xf32> to vector<128xf32>
    %100 = vector.shape_cast %99 : vector<128xf32> to vector<1x128xf32>
    %101 = arith.addf %98, %100 : vector<1x128xf32>
    %c2_76 = arith.constant 2 : index
    %c0_77 = arith.constant 0 : index
    %102 = vector.load %arg5[%c2_76, %c0_77] : memref<4x128xf32, #tpu.memory_space<vmem>>, vector<1x128xf32>
    tpu.vector_store %arg5[%c2_76, %c0_77], %101 {strides = array<i32>} : memref<4x128xf32, #tpu.memory_space<vmem>>, vector<1x128xf32>,
    %c2_78 = arith.constant 2 : index
    %c0_79 = arith.constant 0 : index
    %103 = vector.load %arg6[%c2_78, %c0_79] : memref<4x128xf32, #tpu.memory_space<vmem>>, vector<1x128xf32>
    %cst_80 = arith.constant dense<0.000000e+00> : vector<128xf32>
    %104 = vector.multi_reduction <add>, %97, %cst_80 [0] : vector<2x128xf32> to vector<128xf32>
    %105 = vector.shape_cast %104 : vector<128xf32> to vector<1x128xf32>
    %106 = arith.addf %103, %105 : vector<1x128xf32>
    %c2_81 = arith.constant 2 : index
    %c0_82 = arith.constant 0 : index
    %107 = vector.load %arg6[%c2_81, %c0_82] : memref<4x128xf32, #tpu.memory_space<vmem>>, vector<1x128xf32>
    tpu.vector_store %arg6[%c2_81, %c0_82], %106 {strides = array<i32>} : memref<4x128xf32, #tpu.memory_space<vmem>>, vector<1x128xf32>,
    %c0_83 = arith.constant 0 : index
    %c3_84 = arith.constant 3 : index
    %c0_85 = arith.constant 0 : index
    %c0_86 = arith.constant 0 : index
    %108 = vector.load %arg2[%c0_83, %c3_84, %c0_85, %c0_86] : memref<1x4x2x128xf32, #tpu.memory_space<vmem>>, vector<1x1x2x128xf32>
    %109 = vector.shape_cast %108 : vector<1x1x2x128xf32> to vector<2x128xf32>
    %110 = arith.subf %109, %15 : vector<2x128xf32>
    %111 = math.exp %110 : vector<2x128xf32>
    %112 = arith.mulf %111, %39 : vector<2x128xf32>
    %c3_i32 = arith.constant 3 : i32
    %113 = vector.broadcast %c3_i32 : i32 to vector<2x128xi32>
    %114 = arith.cmpi eq, %41, %113 : vector<2x128xi32>
    %cst_87 = arith.constant 0.000000e+00 : f32
    %115 = vector.broadcast %cst_87 : f32 to vector<2x128xf32>
    %116 = arith.select %114, %112, %115 : vector<2x128xi1>, vector<2x128xf32>
    %cst_88 = arith.constant 1.000000e+00 : f32
    %117 = vector.broadcast %cst_88 : f32 to vector<2x128xf32>
    %118 = arith.addf %112, %117 : vector<2x128xf32>
    %119 = arith.select %114, %118, %112 : vector<2x128xi1>, vector<2x128xf32>
    %c3_89 = arith.constant 3 : index
    %c0_90 = arith.constant 0 : index
    %120 = vector.load %arg5[%c3_89, %c0_90] : memref<4x128xf32, #tpu.memory_space<vmem>>, vector<1x128xf32>
    %cst_91 = arith.constant dense<0.000000e+00> : vector<128xf32>
    %121 = vector.multi_reduction <add>, %116, %cst_91 [0] : vector<2x128xf32> to vector<128xf32>
    %122 = vector.shape_cast %121 : vector<128xf32> to vector<1x128xf32>
    %123 = arith.addf %120, %122 : vector<1x128xf32>
    %c3_92 = arith.constant 3 : index
    %c0_93 = arith.constant 0 : index
    %124 = vector.load %arg5[%c3_92, %c0_93] : memref<4x128xf32, #tpu.memory_space<vmem>>, vector<1x128xf32>
    tpu.vector_store %arg5[%c3_92, %c0_93], %123 {strides = array<i32>} : memref<4x128xf32, #tpu.memory_space<vmem>>, vector<1x128xf32>,
    %c3_94 = arith.constant 3 : index
    %c0_95 = arith.constant 0 : index
    %125 = vector.load %arg6[%c3_94, %c0_95] : memref<4x128xf32, #tpu.memory_space<vmem>>, vector<1x128xf32>
    %cst_96 = arith.constant dense<0.000000e+00> : vector<128xf32>
    %126 = vector.multi_reduction <add>, %119, %cst_96 [0] : vector<2x128xf32> to vector<128xf32>
    %127 = vector.shape_cast %126 : vector<128xf32> to vector<1x128xf32>
    %128 = arith.addf %125, %127 : vector<1x128xf32>
    %c3_97 = arith.constant 3 : index
    %c0_98 = arith.constant 0 : index
    %129 = vector.load %arg6[%c3_97, %c0_98] : memref<4x128xf32, #tpu.memory_space<vmem>>, vector<1x128xf32>
    tpu.vector_store %arg6[%c3_97, %c0_98], %128 {strides = array<i32>} : memref<4x128xf32, #tpu.memory_space<vmem>>, vector<1x128xf32>,
    %c1_i32_99 = arith.constant 1 : i32
    %130 = arith.cmpi eq, %arg0, %c1_i32_99 : i32
    %c0_i32_100 = arith.constant 0 : i32
    %131 = arith.cmpi eq, %arg1, %c0_i32_100 : i32
    %132 = arith.andi %130, %131 : i1
    %133 = arith.extui %132 : i1 to i32
    %c0_i32_101 = arith.constant 0 : i32
    %134 = arith.cmpi ne, %133, %c0_i32_101 : i32
    scf.if %134 {
      %c0_102 = arith.constant 0 : index
      %c0_103 = arith.constant 0 : index
      %135 = vector.load %arg5[%c0_102, %c0_103] : memref<4x128xf32, #tpu.memory_space<vmem>>, vector<4x128xf32>
      %cst_104 = arith.constant dense<0.000000e+00> : vector<4xf32>
      %136 = vector.multi_reduction <add>, %135, %cst_104 [1] : vector<4x128xf32> to vector<4xf32>
      %137 = vector.shape_cast %136 : vector<4xf32> to vector<4x1xf32>
      %cst_105 = arith.constant 2.000000e+00 : f32
      %138 = vector.broadcast %cst_105 : f32 to vector<4x1xf32>
      %139 = arith.mulf %138, %137 : vector<4x1xf32>
      %cst_106 = arith.constant 1.000000e-07 : f32
      %140 = vector.broadcast %cst_106 : f32 to vector<4x1xf32>
      %141 = arith.addf %139, %140 : vector<4x1xf32>
      %c0_107 = arith.constant 0 : index
      %c0_108 = arith.constant 0 : index
      %142 = vector.load %arg6[%c0_107, %c0_108] : memref<4x128xf32, #tpu.memory_space<vmem>>, vector<4x128xf32>
      %cst_109 = arith.constant dense<0.000000e+00> : vector<4xf32>
      %143 = vector.multi_reduction <add>, %142, %cst_109 [1] : vector<4x128xf32> to vector<4xf32>
      %144 = vector.shape_cast %143 : vector<4xf32> to vector<4x1xf32>
      %cst_110 = arith.constant 1.000000e-07 : f32
      %145 = vector.broadcast %cst_110 : f32 to vector<4x1xf32>
      %146 = arith.addf %144, %145 : vector<4x1xf32>
      %147 = arith.divf %141, %146 : vector<4x1xf32>
      %148 = vector.shape_cast %147 : vector<4x1xf32> to vector<1x4x1xf32>
      %cst_111 = arith.constant dense<0.000000e+00> : vector<1xf32>
      %149 = vector.multi_reduction <add>, %148, %cst_111 [1, 2] : vector<1x4x1xf32> to vector<1xf32>
      %150 = vector.shape_cast %149 : vector<1xf32> to vector<1x1x1xf32>
      %151 = vector.extract %150[0, 0, 0] : f32 from vector<1x1x1xf32>
      %cst_112 = arith.constant 4.000000e+00 : f32
      %152 = arith.divf %151, %cst_112 : f32
      %cst_113 = arith.constant 1.000000e+00 : f32
      %153 = arith.subf %cst_113, %152 : f32
      %154 = vector.broadcast %153 : f32 to vector<1x1xf32>
      %c0_114 = arith.constant 0 : index
      %c0_115 = arith.constant 0 : index
      %155 = vector.load %arg4[%c0_114, %c0_115] : memref<1x1xf32, #tpu.memory_space<vmem>>, vector<1x1xf32>
      tpu.vector_store %arg4[%c0_114, %c0_115], %154 {strides = array<i32>} : memref<1x1xf32, #tpu.memory_space<vmem>>, vector<1x1xf32>,
    } else {
    }
    return
  }
  func.func @transform_0(%arg0: i32, %arg1: i32) -> (i32, i32, i32, i32) {
    %c0_i32 = arith.constant 0 : i32
    %c0_i32_0 = arith.constant 0 : i32
    %c0_i32_1 = arith.constant 0 : i32
    return %arg0, %c0_i32, %arg1, %c0_i32_0 : i32, i32, i32, i32
  }
  func.func @transform_1(%arg0: i32, %arg1: i32) -> (i32, i32, i32, i32) {
    %c0_i32 = arith.constant 0 : i32
    %c0_i32_0 = arith.constant 0 : i32
    %c0_i32_1 = arith.constant 0 : i32
    return %arg0, %c0_i32, %arg1, %c0_i32_0 : i32, i32, i32, i32
  }
  func.func @transform_2(%arg0: i32, %arg1: i32) -> (i32, i32) {
    %c0_i32 = arith.constant 0 : i32
    %c0_i32_0 = arith.constant 0 : i32
    %c0_i32_1 = arith.constant 0 : i32
    return %c0_i32, %c0_i32_0 : i32, i32
  }
}

</mosaic_0001>

<llo_original>
// kernel: tpu_custom_call.1
$region0: #{tpu_custom_call.1}
  #allocation0 [shape = 'u32[]', space=smem, size = 0x4, offset = 0x4, fixed_abs, tag = 'smem constant byte address 0x4 - core index']
  #allocation1 [shape = 'u32[144,128]{1,0:T(1,128)}', space=vmem, size = 0x12000, scoped, tag = 'internal scratch']
  #allocation2 [shape = 'f32[4,128]{1,0:T(4,128)}', space=vmem, size = 0x800, scoped, tag = 'scratch operand']
  #allocation3 [shape = 'f32[4,128]{1,0:T(4,128)}', space=vmem, size = 0x800, scoped, tag = 'scratch operand']
  %s0 = inlined_call_operand.hbm [shape: f32[2,4,2,128], index: 0, kind: input, shape index: {}]
  %s1 = inlined_call_operand.hbm [shape: s32[2,1,2,128], index: 1, kind: input, shape index: {}]
  %s2 = inlined_call_operand.hbm [shape: f32[1,1], index: 2, kind: output, shape index: {}]
  %s3 = sld [smem:[#allocation0]]
  $region57: #{tpu_custom_call.1} parent=0
    _
  %s5 = ssub.s32 1, %s3
  %s6 = scalar_select 0, %s5, %s3
  $region1: #{tpu_custom_call.1} parent=0
    #allocation4 [shape = 'u8[8192]{0}', space=vmem, size = 0x2000, scoped, tag = 'input window, operand 0']
    #allocation5 [shape = 's32[2]{0}', space=sflag, size = 0x8, scoped, tag = 'scoped memory for tpu_custom_call.1']
    #allocation6 [shape = 's32[2]{0}', space=sflag, size = 0x8, scoped, tag = 'scoped memory for tpu_custom_call.1']
    #allocation7 [shape = 'u8[2048]{0}', space=vmem, size = 0x800, scoped, tag = 'input window, operand 1']
    #allocation8 [shape = 's32[2]{0}', space=sflag, size = 0x8, scoped, tag = 'scoped memory for tpu_custom_call.1']
    #allocation9 [shape = 'u8[512]{0}', space=vmem, size = 0x400, scoped, tag = 'output window, operand 0, single buffered']
    %7 = vsyncpa [#allocation5], 0
    %s8 = scalar_lea.sflag [#allocation5], 1
    %9 = vsyncpa %s8, 0
    %10 = vsyncpa [#allocation8], 0
    %s11 = scalar_lea.sflag [#allocation8], 1
    %12 = vsyncpa %s11, 0
    %13 = vsyncpa [#allocation6], 0
    loop: start=0, step=1, limit=4
    $region2: #{tpu_custom_call.1} parent=1 // loop_pre_header
      _
    $region3: #{tpu_custom_call.1} parent=1 // loop_header
      %s15 = sphi 0, %s19
      %p16 = scmp.ge.s32.totalorder %s15, 4
      %s22 = sphi 0, %s34
      %s23 = sphi 0, %s30
      %s24 = sphi 0, %s22
      %s25 = sphi 0, %s23
      %s26 = sphi 0, %s24
      %s27 = sphi 0, %s25
      %s39 = sphi 0, %s41
      %s42 = sphi 0, %s39
      %s43 = sphi 0, %s42
      %s59 = sphi 0, %s43
      %s67 = sphi 0, %s69
      %s70 = sphi 0, %s67
      %s71 = sphi 0, %s70
      %s87 = sphi 0, %s71
      %s91 = sphi 0, %s91
      %s93 = sphi 0, %s91
      %s94 = sphi 0, %s93
      %s108 = sphi 0, %s94
    $region4: #{tpu_custom_call.1} parent=1 // loop_header_branch
      %18 = sbr.rel (%p16) target = $region8
    $region5: #{tpu_custom_call.1} parent=1 // loop_body
      %s20 = ssub.s32 %s15, 1
      %s21 = ssub.s32 %s15, 2
      %s28 = sadd.s32 1, %s23
      %p29 = scmp.ge.s32.totalorder %s28, 1
      %s30 = scalar_select %p29, 0, %s28
      %s31 = sadd.s32 1, %s22
      %s32 = scalar_select %p29, %s31, %s22
      %p33 = scmp.ge.s32.totalorder %s32, 2
      %s34 = scalar_select %p33, 0, %s32
      %s35 = ssub.s32 %s22, %s34
      %s36 = ssub.s32 %s23, %s30
      %s37 = sor.u32 %s35, %s36
      %p38 = scmp.eq.s32.totalorder %s37, 0
      %s40 = sadd.s32 %s39, 1
      %s41 = scalar_select %p38, %s39, %s40
      %p44 = pneg %p38
      %p45 = scmp.eq.s32.totalorder %s15, 1
      %p46 = por %p44, %p45
      %p47 = scmp.ne.s32.totalorder %s39, %s42
      %p48 = scmp.eq.s32.totalorder %s15, 0
      %p49 = por %p47, %p48
      %p50 = scmp.ne.s32.totalorder %s39, %s42
      %p51 = scmp.eq.s32.totalorder %s20, 1
      %p52 = por %p50, %p51
      %p53 = scmp.ne.s32.totalorder %s42, %s43
      %p54 = scmp.eq.s32.totalorder %s20, 0
      %p55 = por %p53, %p54
      %p56 = scmp.ne.s32.totalorder %s42, %s43
      %p57 = scmp.eq.s32.totalorder %s21, 1
      %p58 = por %p56, %p57
      %p60 = scmp.ne.s32.totalorder %s43, %s59
      %p61 = scmp.eq.s32.totalorder %s21, 0
      %p62 = por %p60, %p61
      %s63 = ssub.s32 %s22, %s34
      %s64 = ssub.s32 %s23, %s30
      %s65 = sor.u32 %s63, %s64
      %p66 = scmp.eq.s32.totalorder %s65, 0
      %s68 = sadd.s32 %s67, 1
      %s69 = scalar_select %p66, %s67, %s68
      %p72 = pneg %p66
      %p73 = scmp.eq.s32.totalorder %s15, 1
      %p74 = por %p72, %p73
      %p75 = scmp.ne.s32.totalorder %s67, %s70
      %p76 = scmp.eq.s32.totalorder %s15, 0
      %p77 = por %p75, %p76
      %p78 = scmp.ne.s32.totalorder %s67, %s70
      %p79 = scmp.eq.s32.totalorder %s20, 1
      %p80 = por %p78, %p79
      %p81 = scmp.ne.s32.totalorder %s70, %s71
      %p82 = scmp.eq.s32.totalorder %s20, 0
      %p83 = por %p81, %p82
      %p84 = scmp.ne.s32.totalorder %s70, %s71
      %p85 = scmp.eq.s32.totalorder %s21, 1
      %p86 = por %p84, %p85
      %p88 = scmp.ne.s32.totalorder %s71, %s87
      %p89 = scmp.eq.s32.totalorder %s21, 0
      %p90 = por %p88, %p89
      %s92 = sadd.s32 %s91, 1
      %p95 = scmp.eq.s32.totalorder %s15, 1
      %p96 = scmp.ne.s32.totalorder %s91, %s93
      %p97 = scmp.eq.s32.totalorder %s15, 0
      %p98 = por %p96, %p97
      %p99 = scmp.ne.s32.totalorder %s91, %s93
      %p100 = scmp.eq.s32.totalorder %s20, 1
      %p101 = por %p99, %p100
      %p102 = scmp.ne.s32.totalorder %s93, %s94
      %p103 = scmp.eq.s32.totalorder %s20, 0
      %p104 = por %p102, %p103
      %p105 = scmp.ne.s32.totalorder %s93, %s94
      %p106 = scmp.eq.s32.totalorder %s21, 1
      %p107 = por %p105, %p106
      %p109 = scmp.ne.s32.totalorder %s94, %s108
      %p110 = scmp.eq.s32.totalorder %s21, 0
      %p111 = por %p109, %p110
      %p112 = scmp.le.s32.totalorder 1, %s15
      %p113 = scmp.lt.s32.totalorder %s15, 3
      %p114 = pnand %p112, %p113
      %p115 = pneg %p114
      // Predicated region
      $region9: #{tpu_custom_call.1} parent=5 // pred_check
        _
      $region10: #{tpu_custom_call.1} parent=5 // pred_check_branch
        %117 = sbr.rel (%p114) target = $region12
      $region11: #{tpu_custom_call.1} parent=5 // pred_region
        %s118 = ssub.s32 %s15, 1
      $region12: #{tpu_custom_call.1} parent=5 // pred_fallthru
        _
      %p119 = scmp.lt.s32.totalorder %s15, 2
      // Predicated region
      $region13: #{tpu_custom_call.1} parent=5 // pred_check
        %p120 = pneg %p119
      $region14: #{tpu_custom_call.1} parent=5 // pred_check_branch
        %122 = sbr.rel (%p120) target = $region16
      $region15: #{tpu_custom_call.1} parent=5 // pred_region
        // Predicated region
        $region17: #{tpu_custom_call.1} parent=15 // pred_check
          %p123 = pneg %p49
        $region18: #{tpu_custom_call.1} parent=15 // pred_check_branch
          %125 = sbr.rel (%p123) target = $region20
        $region19: #{tpu_custom_call.1} parent=15 // pred_region
          %s126 = sand.u32 %s39, 1
          %s127 = scalar_lea.sflag [#allocation5], %s126
          %s128 = sand.u32 %s39, 1
          %s129 = smul.addr %s128, 8
          %s130 = scalar_lea.vmem [#allocation4], %s129
          %s132 = ssub.s32 128, 128
          %133 = vsyncadd %s127, %s132
          %s134 = smul.addr %s22, 4
          %s135 = sadd.s32 %s23, %s134
          %s136 = smul.addr %s135, 32
          %s137 = scalar_lea.hbm %s0, %s136
          %s138 = sshll.u32 %s130, 4
          %s139 = int_to_ptr.vmem [resolvable:$true] %s138
          %144 = dma.hbm_to_vmem [thread:$0]  %s137, 128, %s139, %s127, 32, 32, 2
        $region20: #{tpu_custom_call.1} parent=15 // pred_fallthru
          _
        // Predicated region
        $region21: #{tpu_custom_call.1} parent=15 // pred_check
          %p145 = pneg %p77
        $region22: #{tpu_custom_call.1} parent=15 // pred_check_branch
          %147 = sbr.rel (%p145) target = $region24
        $region23: #{tpu_custom_call.1} parent=15 // pred_region
          %s148 = sand.u32 %s67, 1
          %s149 = scalar_lea.sflag [#allocation8], %s148
          %s150 = sand.u32 %s67, 1
          %s151 = smul.addr %s150, 2
          %s152 = scalar_lea.vmem [#allocation7], %s151
          %s154 = ssub.s32 32, 32
          %155 = vsyncadd %s149, %s154
          %s156 = sadd.s32 %s23, %s22
          %s157 = smul.addr %s156, 32
          %s158 = scalar_lea.hbm %s1, %s157
          %s160 = sshll.u32 %s152, 4
          %s161 = int_to_ptr.vmem [resolvable:$true] %s160
          %163 = dma.hbm_to_vmem [thread:$0]  %s158, 32, %s161, %s149
        $region24: #{tpu_custom_call.1} parent=15 // pred_fallthru
          _
      $region16: #{tpu_custom_call.1} parent=5 // pred_fallthru
        _
      %p164 = scmp.le.s32.totalorder 1, %s15
      %p165 = scmp.lt.s32.totalorder %s15, 3
      %p166 = pnand %p164, %p165
      %p167 = pneg %p166
      // Predicated region
      $region25: #{tpu_custom_call.1} parent=5 // pred_check
        _
      $region26: #{tpu_custom_call.1} parent=5 // pred_check_branch
        %169 = sbr.rel (%p166) target = $region28
      $region27: #{tpu_custom_call.1} parent=5 // pred_region
        %s170 = ssub.s32 %s15, 1
        %s171 = sand.u32 %s42, 1
        %s172 = scalar_lea.sflag [#allocation5], %s171
        %s173 = sand.u32 %s42, 1
        %s174 = smul.addr %s173, 8
        %s175 = scalar_lea.vmem [#allocation4], %s174
        // Predicated region
        $region29: #{tpu_custom_call.1} parent=27 // pred_check
          %p176 = pneg %p55
        $region30: #{tpu_custom_call.1} parent=27 // pred_check_branch
          %178 = sbr.rel (%p176) target = $region32
        $region31: #{tpu_custom_call.1} parent=27 // pred_region
          %179 = dma.done %s172, 128
        $region32: #{tpu_custom_call.1} parent=27 // pred_fallthru
          _
        %s180 = sand.u32 %s70, 1
        %s181 = scalar_lea.sflag [#allocation8], %s180
        %s182 = sand.u32 %s70, 1
        %s183 = smul.addr %s182, 2
        %s184 = scalar_lea.vmem [#allocation7], %s183
        // Predicated region
        $region33: #{tpu_custom_call.1} parent=27 // pred_check
          %p185 = pneg %p83
        $region34: #{tpu_custom_call.1} parent=27 // pred_check_branch
          %187 = sbr.rel (%p185) target = $region36
        $region35: #{tpu_custom_call.1} parent=27 // pred_region
          %188 = dma.done %s181, 32
        $region36: #{tpu_custom_call.1} parent=27 // pred_fallthru
          _
        %s189 = sand.u32 %s42, 1
        %s190 = scalar_lea.sflag [#allocation5], %s189
        %s191 = sand.u32 %s42, 1
        %s192 = smul.addr %s191, 8
        %s193 = scalar_lea.vmem [#allocation4], %s192
        %p194 = pneg %p55
        %p195 = pneg %p52
        %s196 = sand.u32 %s70, 1
        %s197 = scalar_lea.sflag [#allocation8], %s196
        %s198 = sand.u32 %s70, 1
        %s199 = smul.addr %s198, 2
        %s200 = scalar_lea.vmem [#allocation7], %s199
        %p201 = pneg %p83
        %p202 = pneg %p80
        %p203 = pneg %p104
        %p204 = pneg %p101
        %p205 = scmp.eq.s32.totalorder %s24, 0
        %p206 = scmp.eq.s32.totalorder %s25, 0
        %p207 = pnand %p205, %p206
        %p208 = pneg %p207
        // Predicated region
        $region37: #{tpu_custom_call.1} parent=27 // pred_check
          _
        $region38: #{tpu_custom_call.1} parent=27 // pred_check_branch
          %210 = sbr.rel (%p207) target = $region40
        $region39: #{tpu_custom_call.1} parent=27 // pred_region
          %211 = vst [vmem:[#allocation2] sm:$0xf] 0.0
          %212 = vst [vmem:[#allocation3] sm:$0xf] 0.0
        $region40: #{tpu_custom_call.1} parent=27 // pred_fallthru
          _
        %v213 = vld [vmem:[%s175] sm:$0x3]
        %s214 = scalar_lea.vmem %s175, 2 [#allocation4]
        %v215 = vld [vmem:[%s214] sm:$0x3]
        %v216 = vmax.f32 %v213, %v215
        %s217 = scalar_lea.vmem %s175, 4 [#allocation4]
        %v218 = vld [vmem:[%s217] sm:$0x3]
        %v219 = vmax.f32 %v216, %v218
        %s220 = scalar_lea.vmem %s175, 6 [#allocation4]
        %v221 = vld [vmem:[%s220] sm:$0x3]
        %v222 = vmax.f32 %v219, %v221
        %v223 = vsub.f32 %v213, %v222
        %v224 = vmul.f32 %v223, 1.442695
        %v225 = vpow.pop %v224
        %v226 = vsub.f32 %v215, %v222
        %v227 = vmul.f32 %v226, 1.442695
        %v228 = vpow.pop %v227
        %v229 = vadd.f32 %v225, %v228
        %v230 = vsub.f32 %v218, %v222
        %v231 = vmul.f32 %v230, 1.442695
        %v232 = vpow.pop %v231
        %v233 = vadd.f32 %v229, %v232
        %v234 = vsub.f32 %v221, %v222
        %v235 = vmul.f32 %v234, 1.442695
        %v236 = vpow.pop %v235
        %v237 = vadd.f32 %v233, %v236
        %v238 = vrcp.pop %v237
        %v239 = vmul.f32 %v237, %v238
        %v240 = vsub.f32 2.0, %v239
        %v241 = vmul.f32 %v238, %v240
        %v242 = vld [vmem:[%s184] sm:$0x3]
        %v243 = vmul.f32 %v225, %v241
        %vm244 = vcmp.eq.s32.totalorder %v242, 0
        %v245 = vsel %vm244, %v243, 0.0
        %v246 = vadd.f32 %v243, 1.0
        %v247 = vsel %vm244, %v246, %v243
        %v248 = vld [vmem:[#allocation2] sm:$0x1]
        %vm249 = vcmask 1041408
        %v250 = vsel %vm249, %v245, 0.0
        %v251 = vrot.slane %v250, 4
        %v252 = vadd.f32 %v250, %v251
        %v253 = vrot.slane %v252, 2
        %v254 = vadd.f32 %v252, %v253
        %v255 = vrot.slane %v254, 1
        %v256 = vadd.f32 %v254, %v255
        %v257 = vadd.f32 %v248, %v256
        %258 = vst [vmem:[#allocation2] sm:$0x1] %v257
        %v259 = vld [vmem:[#allocation3] sm:$0x1]
        %v260 = vsel %vm249, %v247, 0.0
        %v261 = vrot.slane %v260, 4
        %v262 = vadd.f32 %v260, %v261
        %v263 = vrot.slane %v262, 2
        %v264 = vadd.f32 %v262, %v263
        %v265 = vrot.slane %v264, 1
        %v266 = vadd.f32 %v264, %v265
        %v267 = vadd.f32 %v259, %v266
        %268 = vst [vmem:[#allocation3] sm:$0x1] %v267
        %v269 = vld [vmem:[%s214] sm:$0x3]
        %v270 = vsub.f32 %v269, %v222
        %v271 = vmul.f32 %v270, 1.442695
        %v272 = vpow.pop %v271
        %v273 = vmul.f32 %v272, %v241
        %vm274 = vcmp.eq.s32.totalorder %v242, 1
        %v275 = vsel %vm274, %v273, 0.0
        %v276 = vadd.f32 %v273, 1.0
        %v277 = vsel %vm274, %v276, %v273
        %v278 = vld [vmem:[#allocation2 + $0x1] sm:$0x1]
        %v279 = vsel %vm249, %v275, 0.0
        %v280 = vrot.slane %v279, 4
        %v281 = vadd.f32 %v279, %v280
        %v282 = vrot.slane %v281, 2
        %v283 = vadd.f32 %v281, %v282
        %v284 = vrot.slane %v283, 1
        %v285 = vadd.f32 %v283, %v284
        %v286 = vadd.f32 %v278, %v285
        %287 = vst [vmem:[#allocation2 + $0x1] sm:$0x1] %v286
        %v288 = vld [vmem:[#allocation3 + $0x1] sm:$0x1]
        %v289 = vsel %vm249, %v277, 0.0
        %v290 = vrot.slane %v289, 4
        %v291 = vadd.f32 %v289, %v290
        %v292 = vrot.slane %v291, 2
        %v293 = vadd.f32 %v291, %v292
        %v294 = vrot.slane %v293, 1
        %v295 = vadd.f32 %v293, %v294
        %v296 = vadd.f32 %v288, %v295
        %297 = vst [vmem:[#allocation3 + $0x1] sm:$0x1] %v296
        %v298 = vld [vmem:[%s217] sm:$0x3]
        %v299 = vsub.f32 %v298, %v222
        %v300 = vmul.f32 %v299, 1.442695
        %v301 = vpow.pop %v300
        %v302 = vmul.f32 %v301, %v241
        %vm303 = vcmp.eq.s32.totalorder %v242, 2
        %v304 = vsel %vm303, %v302, 0.0
        %v305 = vadd.f32 %v302, 1.0
        %v306 = vsel %vm303, %v305, %v302
        %v307 = vld [vmem:[#allocation2 + $0x2] sm:$0x1]
        %v308 = vsel %vm249, %v304, 0.0
        %v309 = vrot.slane %v308, 4
        %v310 = vadd.f32 %v308, %v309
        %v311 = vrot.slane %v310, 2
        %v312 = vadd.f32 %v310, %v311
        %v313 = vrot.slane %v312, 1
        %v314 = vadd.f32 %v312, %v313
        %v315 = vadd.f32 %v307, %v314
        %316 = vst [vmem:[#allocation2 + $0x2] sm:$0x1] %v315
        %v317 = vld [vmem:[#allocation3 + $0x2] sm:$0x1]
        %v318 = vsel %vm249, %v306, 0.0
        %v319 = vrot.slane %v318, 4
        %v320 = vadd.f32 %v318, %v319
        %v321 = vrot.slane %v320, 2
        %v322 = vadd.f32 %v320, %v321
        %v323 = vrot.slane %v322, 1
        %v324 = vadd.f32 %v322, %v323
        %v325 = vadd.f32 %v317, %v324
        %326 = vst [vmem:[#allocation3 + $0x2] sm:$0x1] %v325
        %v327 = vld [vmem:[%s220] sm:$0x3]
        %v328 = vsub.f32 %v327, %v222
        %v329 = vmul.f32 %v328, 1.442695
        %v330 = vpow.pop %v329
        %v331 = vmul.f32 %v330, %v241
        %vm332 = vcmp.eq.s32.totalorder %v242, 3
        %v333 = vsel %vm332, %v331, 0.0
        %v334 = vadd.f32 %v331, 1.0
        %v335 = vsel %vm332, %v334, %v331
        %v336 = vld [vmem:[#allocation2 + $0x3] sm:$0x1]
        %v337 = vsel %vm249, %v333, 0.0
        %v338 = vrot.slane %v337, 4
        %v339 = vadd.f32 %v337, %v338
        %v340 = vrot.slane %v339, 2
        %v341 = vadd.f32 %v339, %v340
        %v342 = vrot.slane %v341, 1
        %v343 = vadd.f32 %v341, %v342
        %v344 = vadd.f32 %v336, %v343
        %345 = vst [vmem:[#allocation2 + $0x3] sm:$0x1] %v344
        %v346 = vld [vmem:[#allocation3 + $0x3] sm:$0x1]
        %v347 = vsel %vm249, %v335, 0.0
        %v348 = vrot.slane %v347, 4
        %v349 = vadd.f32 %v347, %v348
        %v350 = vrot.slane %v349, 2
        %v351 = vadd.f32 %v349, %v350
        %v352 = vrot.slane %v351, 1
        %v353 = vadd.f32 %v351, %v352
        %v354 = vadd.f32 %v346, %v353
        %355 = vst [vmem:[#allocation3 + $0x3] sm:$0x1] %v354
        %p356 = scmp.eq.s32.totalorder %s24, 1
        %p357 = pnand %p356, %p206
        %p358 = pneg %p357
        // Predicated region
        $region41: #{tpu_custom_call.1} parent=27 // pred_check
          _
        $region42: #{tpu_custom_call.1} parent=27 // pred_check_branch
          %360 = sbr.rel (%p357) target = $region44
        $region43: #{tpu_custom_call.1} parent=27 // pred_region
          %v361 = vld [vmem:[#allocation2] sm:$0xf]
          %vm362 = vcmask 1043456
          %v363 = vsel %vm362, %v361, 0.0
          %364 = vadd.xlane.f32.xlu0 %v363
          %v365 = vpop.xlane.xlu0 %364
          %v366 = vmul.f32 %v365, 2.0
          %v367 = vadd.f32 %v366, 1e-07
          %v368 = vld [vmem:[#allocation3] sm:$0xf]
          %v369 = vsel %vm362, %v368, 0.0
          %370 = vadd.xlane.f32.xlu0 %v369
          %v371 = vpop.xlane.xlu0 %370
          %v372 = vadd.f32 %v371, 1e-07
          %v373 = vrcp.pop %v372
          %v374 = vmul.f32 %v367, %v373
          %vm375 = vcmask 3072
          %v376 = vsel %vm375, %v374, 0.0
          %377 = vadd.xlane.f32.xlu0 %v376
          %v378 = vpop.xlane.xlu0 %377
          %v379 = vrot.slane %v378, 4
          %v380 = vadd.f32 %v378, %v379
          %v381 = vrot.slane %v380, 2
          %v382 = vadd.f32 %v380, %v381
          %v383 = vrot.slane %v382, 1
          %v384 = vadd.f32 %v382, %v383
          %s385 = vtos %v384
          %v386 = vrcp.pop 4.0
          %s387 = vtos %v386
          %s388 = smul.f32 %s385, %s387
          %s389 = ssub.f32 1.0, %s388
          %v390 = vstv %s389
          %vm391 = vcmask 0
          %392 = vst.msk [vmem:[#allocation9] sm:$0x1] %vm391, %v390
        $region44: #{tpu_custom_call.1} parent=27 // pred_fallthru
          _
        // Predicated region
        $region45: #{tpu_custom_call.1} parent=27 // pred_check
          %p393 = pneg %p101
        $region46: #{tpu_custom_call.1} parent=27 // pred_check_branch
          %395 = sbr.rel (%p393) target = $region48
        $region47: #{tpu_custom_call.1} parent=27 // pred_region
          %s397 = ssub.s32 16, 16
          %398 = vsyncadd [#allocation6], %s397
          %s400 = sshll.u32 [#allocation9], 4
          %s401 = int_to_ptr.vmem [resolvable:$true] %s400
          %403 = dma.vmem_to_hbm [thread:$0]  %s401, 16, %s2, [#allocation6]
        $region48: #{tpu_custom_call.1} parent=27 // pred_fallthru
          _
        // Predicated region
        $region49: #{tpu_custom_call.1} parent=27 // pred_check
          %p404 = pneg %p101
        $region50: #{tpu_custom_call.1} parent=27 // pred_check_branch
          %406 = sbr.rel (%p404) target = $region52
        $region51: #{tpu_custom_call.1} parent=27 // pred_region
          %407 = dma.done [#allocation6], 16
        $region52: #{tpu_custom_call.1} parent=27 // pred_fallthru
          _
      $region28: #{tpu_custom_call.1} parent=5 // pred_fallthru
        _
      %p408 = scmp.le.s32.totalorder 2, %s15
      // Predicated region
      $region53: #{tpu_custom_call.1} parent=5 // pred_check
        %p409 = pneg %p408
      $region54: #{tpu_custom_call.1} parent=5 // pred_check_branch
        %411 = sbr.rel (%p409) target = $region56
      $region55: #{tpu_custom_call.1} parent=5 // pred_region
        %s412 = ssub.s32 %s15, 2
      $region56: #{tpu_custom_call.1} parent=5 // pred_fallthru
        _
    $region6: #{tpu_custom_call.1} parent=1 // loop_footer
      %s19 = sadd.s32 1, %s15
    $region7: #{tpu_custom_call.1} parent=1 // loop_footer_branch
      %14 = sbr.rel target = $region3
    $region8: #{tpu_custom_call.1} parent=1 // loop_exit
      _
    %413 = vsyncpa [#allocation5], 1
    %s414 = scalar_lea.sflag [#allocation5], 1
    %415 = vsyncpa %s414, 1
    %416 = vsyncpa [#allocation8], 1
    %s417 = scalar_lea.sflag [#allocation8], 1
    %418 = vsyncpa %s417, 1
    %419 = vsyncpa [#allocation6], 1
    %s420 = scalar_lea.sflag [#allocation6], 1
    %421 = vsyncpa %s420, 1

</llo_original>
